<compile_context>
chip_gen: v7x
topology: tpu7x:2x2x1
jax: 0.10.0
libtpu: 0.0.40
codegen_flags: <defaults>
</compile_context>

<pallas_src>
import functools
import math

import jax
import jax.numpy as jnp
from jax.experimental import pallas as pl
from jax.experimental.pallas import tpu as pltpu

_EPS = 1e-12                    # torch.nn.functional.normalize default eps
_MIN_GRID_STEPS = 8             # keep both v7x TCs fed / DMA pipelined
_MIN_BLOCK_BYTES = 256 * 1024   # don't over-split tiny inputs


def _cdiv(a, b):
    return -(-a // b)


@functools.lru_cache(maxsize=None)
def _chip_budgets():
    """(target_block_bytes, max_block_bytes, vmem_capacity_bytes) per chip gen."""
    vmem_cap = 64 << 20                      # conservative default (v7x per-TC)
    try:
        info = pltpu.get_tpu_info()
        vmem_cap = int(getattr(info, "vmem_capacity_bytes", vmem_cap)) or vmem_cap
    except Exception:
        pass
    if vmem_cap >= (100 << 20):              # v5e / v6e: 128 MiB VMEM
        return (8 << 20), (16 << 20), vmem_cap
    return (4 << 20), (8 << 20), vmem_cap    # v7x / unknown: 64 MiB VMEM


def _vmem_limit(per_step_block_bytes, vmem_cap):
    """Size the VMEM limit from the real footprint (2x double-buffered) + margin."""
    need = int(2.5 * per_step_block_bytes) + (2 << 20)
    return int(max(8 << 20, min(need, (vmem_cap * 3) // 4)))


# ----------------------------- kernel bodies ------------------------------ #

def _finish(xf, sq_sum, out_dtype):
    # max(sqrt(ss), eps) == sqrt(max(ss, eps^2)); eps^2 = 1e-24 is a normal f32.
    inv = jax.lax.rsqrt(jnp.maximum(sq_sum, _EPS * _EPS))     # EUP
    return (xf * inv).astype(out_dtype)                       # f32 mul, cast once


def _l2norm_mid_kernel(x_ref, o_ref):
    # Block: (tile_lead, C, tile_t). Reduce over C (sublane axis); lanes dense.
    xf = x_ref[...].astype(jnp.float32)
    ss = jnp.sum(xf * xf, axis=1, keepdims=True)
    o_ref[...] = _finish(xf, ss, o_ref.dtype)


def _l2norm_last_kernel(x_ref, o_ref):
    # Block: (tile_rows, C) with C >= 128. Reduce over the lane axis.
    xf = x_ref[...].astype(jnp.float32)
    ss = jnp.sum(xf * xf, axis=-1, keepdims=True)
    o_ref[...] = _finish(xf, ss, o_ref.dtype)


def _l2norm_last_packed_kernel(x_ref, sel_ref, o_ref):
    # Block: (tile_rp, g*C) — g original rows packed per lane slab.  sel_ref is
    # the (g*C, g*C) block-diagonal 0/1 selector; sq @ sel gives each element
    # the sum-of-squares of its own segment (MXU, free under the DMA bound).
    xf = x_ref[...].astype(jnp.float32)
    sq = xf * xf
    ss = jnp.dot(sq, sel_ref[...], preferred_element_type=jnp.float32)
    inv = jax.lax.rsqrt(jnp.maximum(ss, _EPS * _EPS))
    o_ref[...] = (xf * inv).astype(o_ref.dtype)


# ------------------------------- wrappers ---------------------------------- #

def _l2_normalize_mid(x3):
    """x3: (lead, C, trail), normalize along axis=1."""
    lead, c, trail = x3.shape
    itemsize = jnp.dtype(x3.dtype).itemsize
    target, max_block, vmem_cap = _chip_budgets()

    # Lane tile: multiple of 128 (ragged tail handled by Pallas) or full extent.
    if trail <= 128:
        tile_t = trail                      # masked stores only for tiny trails
    else:
        lanes_budget = max(128, (target // (c * itemsize)) // 128 * 128)
        tile_t = min(lanes_budget, (trail // 128) * 128)

    # Lead tile: fatten the block toward the per-generation target when
    # C * tile_t is small (the biggest lever for small-channel NCHW inputs).
    tile_lead = max(1, min(lead, target // max(1, c * tile_t * itemsize)))

    # Keep enough grid steps to feed both v7x TensorCores / overlap DMA.
    while _cdiv(lead, tile_lead) * _cdiv(trail, tile_t) < _MIN_GRID_STEPS:
        if tile_lead * c * tile_t * itemsize <= _MIN_BLOCK_BYTES:
            break
        if tile_lead > 1:
            tile_lead = max(1, tile_lead // 2)
        elif tile_t > 128:
            tile_t = max(128, (tile_t // 2) // 128 * 128)
        else:
            break

    # TODO(synk): for extreme C where even a (1, C, 128) slice exceeds the
    # per-block cap, split C over a reduction grid axis (two-pass sum-of-squares)
    # instead of relying on a single oversized block.
    blk = tile_lead * c * tile_t * itemsize
    grid = (_cdiv(lead, tile_lead), _cdiv(trail, tile_t))

    return pl.pallas_call(
        _l2norm_mid_kernel,
        out_shape=jax.ShapeDtypeStruct((lead, c, trail), x3.dtype),
        grid_spec=pltpu.PrefetchScalarGridSpec(
            num_scalar_prefetch=0,
            grid=grid,
            in_specs=[pl.BlockSpec((tile_lead, c, tile_t), lambda n, t: (n, 0, t))],
            out_specs=pl.BlockSpec((tile_lead, c, tile_t), lambda n, t: (n, 0, t)),
        ),
        compiler_params=pltpu.CompilerParams(
            dimension_semantics=("parallel", "parallel"),
            vmem_limit_bytes=_vmem_limit(2 * blk, vmem_cap),
        ),
    )(x3)


def _l2_normalize_last(x2):
    """x2: (rows, C), normalize along the last axis (C >= 128 or packing N/A)."""
    rows, c = x2.shape
    itemsize = jnp.dtype(x2.dtype).itemsize
    target, max_block, vmem_cap = _chip_budgets()

    if rows <= 8:
        tile_rows = rows                    # full extent (always legal)
    else:
        rows_budget = max(8, (target // (c * itemsize)) // 8 * 8)
        tile_rows = min(rows_budget, (rows // 8) * 8)

    while _cdiv(rows, tile_rows) < _MIN_GRID_STEPS:
        if tile_rows <= 8 or tile_rows * c * itemsize <= _MIN_BLOCK_BYTES:
            break
        tile_rows = max(8, (tile_rows // 2) // 8 * 8)

    blk = tile_rows * c * itemsize
    grid = (_cdiv(rows, tile_rows),)

    return pl.pallas_call(
        _l2norm_last_kernel,
        out_shape=jax.ShapeDtypeStruct((rows, c), x2.dtype),
        grid_spec=pltpu.PrefetchScalarGridSpec(
            num_scalar_prefetch=0,
            grid=grid,
            in_specs=[pl.BlockSpec((tile_rows, c), lambda i: (i, 0))],
            out_specs=pl.BlockSpec((tile_rows, c), lambda i: (i, 0)),
        ),
        compiler_params=pltpu.CompilerParams(
            dimension_semantics=("parallel",),
            vmem_limit_bytes=_vmem_limit(2 * blk, vmem_cap),
        ),
    )(x2)


def _l2_normalize_last_packed(x2, g):
    """x2: (rows, C) with C < 128; pack g rows per >=128-lane slab (rows % g == 0)."""
    rows, c = x2.shape
    gc = g * c
    rp = rows // g
    xp = x2.reshape(rp, gc)                                   # free, row-major
    seg = jnp.arange(gc, dtype=jnp.int32) // c
    sel = (seg[:, None] == seg[None, :]).astype(jnp.float32)  # block-diag 0/1

    itemsize = jnp.dtype(x2.dtype).itemsize
    target, max_block, vmem_cap = _chip_budgets()

    if rp <= 8:
        tile_rp = rp
    else:
        rows_budget = max(8, (target // (gc * itemsize)) // 8 * 8)
        tile_rp = min(rows_budget, (rp // 8) * 8)

    while _cdiv(rp, tile_rp) < _MIN_GRID_STEPS:
        if tile_rp <= 8 or tile_rp * gc * itemsize <= _MIN_BLOCK_BYTES:
            break
        tile_rp = max(8, (tile_rp // 2) // 8 * 8)

    blk = tile_rp * gc * itemsize
    sel_bytes = gc * gc * 4
    grid = (_cdiv(rp, tile_rp),)

    yp = pl.pallas_call(
        _l2norm_last_packed_kernel,
        out_shape=jax.ShapeDtypeStruct((rp, gc), x2.dtype),
        grid_spec=pltpu.PrefetchScalarGridSpec(
            num_scalar_prefetch=0,
            grid=grid,
            in_specs=[pl.BlockSpec((tile_rp, gc), lambda i: (i, 0)),
                      pl.BlockSpec((gc, gc), lambda i: (0, 0))],
            out_specs=pl.BlockSpec((tile_rp, gc), lambda i: (i, 0)),
        ),
        compiler_params=pltpu.CompilerParams(
            dimension_semantics=("parallel",),
            vmem_limit_bytes=_vmem_limit(2 * blk + 2 * sel_bytes, vmem_cap),
        ),
    )(xp, sel)
    return yp.reshape(rows, c)


def l2norm(x, dim=1):
    """Pallas equivalent of L2Norm(dim).forward(x) == F.normalize(x, p=2, dim)."""
    ndim = x.ndim
    dim = dim % ndim
    shape = x.shape
    c = shape[dim]

    if dim == ndim - 1:
        rows = math.prod(shape[:-1]) if ndim > 1 else 1
        x2 = x.reshape(rows, c)
        if c < 128:
            # Smallest g making g*C a multiple of 128 -> unmasked full-lane stores.
            g = 128 // math.gcd(c, 128)
            if g * c <= 512 and rows % g == 0 and rows >= g:
                return _l2_normalize_last_packed(x2, g).reshape(shape)
        return _l2_normalize_last(x2).reshape(shape)

    # Reduction axis in the middle (e.g. NCHW dim=1): free reshape to
    # (lead, C, trail) — no transpose, spatial dims stay lane-dense.
    lead = math.prod(shape[:dim]) if dim > 0 else 1
    trail = math.prod(shape[dim + 1:])
    return _l2_normalize_mid(x.reshape(lead, c, trail)).reshape(shape)


if __name__ == "__main__":
    key = jax.random.PRNGKey(0)
    k0, k1, k2 = jax.random.split(key, 3)

    # NCHW input, matching the PyTorch module's default (dim=1 = channels).
    x = jax.random.normal(k0, (2, 4, 16, 16), dtype=jnp.float32)
    y = jax.block_until_ready(l2norm(x, dim=1))
    ref = x / jnp.maximum(jnp.sqrt(jnp.sum(x * x, axis=1, keepdims=True)), _EPS)
    assert y.shape == x.shape and y.dtype == x.dtype
    assert jnp.allclose(y, ref, atol=1e-5, rtol=1e-5)

    # dim == last axis with C < 128 -> lane-packed path (g rows per 128-lane slab).
    x2 = jax.random.normal(k1, (8, 32), dtype=jnp.float32)
    y2 = jax.block_until_ready(l2norm(x2, dim=-1))
    ref2 = x2 / jnp.maximum(
        jnp.sqrt(jnp.sum(x2 * x2, axis=-1, keepdims=True)), _EPS)
    assert jnp.allclose(y2, ref2, atol=1e-5, rtol=1e-5)

    # dim == last axis with C >= 128 -> plain lane-reduction path.
    x3 = jax.random.normal(k2, (16, 256), dtype=jnp.float32)
    y3 = jax.block_until_ready(l2norm(x3, dim=-1))
    ref3 = x3 / jnp.maximum(
        jnp.sqrt(jnp.sum(x3 * x3, axis=-1, keepdims=True)), _EPS)
    assert jnp.allclose(y3, ref3, atol=1e-5, rtol=1e-5)

    print("KERNEL_OK")
</pallas_src>

<mosaic_0001>
module attributes {stable_mosaic.version = 11 : i64} {
  func.func @_l2norm_mid_kernel(%arg0: i32, %arg1: i32, %arg2: memref<2x4x256xf32, #tpu.memory_space<vmem>>, %arg3: memref<2x4x256xf32, #tpu.memory_space<vmem>>) attributes {dimension_semantics = [#tpu.dimension_semantics<parallel>, #tpu.dimension_semantics<parallel>], iteration_bounds = array<i64: 1, 1>, scalar_prefetch = 0 : i64, scratch_operands = 0 : i64, tpu.core_type = #tpu.core_type<tc>, window_params = [{transform_indices = @transform_0, window_bounds = array<i64: 2, 4, 256>}, {transform_indices = @transform_1, window_bounds = array<i64: 2, 4, 256>}]} {
    %c0 = arith.constant 0 : index
    %c0_0 = arith.constant 0 : index
    %c0_1 = arith.constant 0 : index
    %0 = vector.load %arg2[%c0, %c0_0, %c0_1] : memref<2x4x256xf32, #tpu.memory_space<vmem>>, vector<2x4x256xf32>
    %1 = arith.mulf %0, %0 : vector<2x4x256xf32>
    %cst = arith.constant dense<0.000000e+00> : vector<2x256xf32>
    %2 = vector.multi_reduction <add>, %1, %cst [1] : vector<2x4x256xf32> to vector<2x256xf32>
    %3 = vector.shape_cast %2 : vector<2x256xf32> to vector<2x1x256xf32>
    %cst_2 = arith.constant 1.000000e-24 : f32
    %4 = vector.broadcast %cst_2 : f32 to vector<2x1x256xf32>
    %5 = arith.maximumf %3, %4 : vector<2x1x256xf32>
    %6 = math.rsqrt %5 : vector<2x1x256xf32>
    %7 = vector.broadcast %6 : vector<2x1x256xf32> to vector<2x4x256xf32>
    %8 = arith.mulf %0, %7 : vector<2x4x256xf32>
    %c0_3 = arith.constant 0 : index
    %c0_4 = arith.constant 0 : index
    %c0_5 = arith.constant 0 : index
    %9 = vector.load %arg3[%c0_3, %c0_4, %c0_5] : memref<2x4x256xf32, #tpu.memory_space<vmem>>, vector<2x4x256xf32>
    tpu.vector_store %arg3[%c0_3, %c0_4, %c0_5], %8 {strides = array<i32>} : memref<2x4x256xf32, #tpu.memory_space<vmem>>, vector<2x4x256xf32>,
    return
  }
  func.func @transform_0(%arg0: i32, %arg1: i32) -> (i32, i32, i32) {
    %c0_i32 = arith.constant 0 : i32
    %c0_i32_0 = arith.constant 0 : i32
    return %arg0, %c0_i32, %arg1 : i32, i32, i32
  }
  func.func @transform_1(%arg0: i32, %arg1: i32) -> (i32, i32, i32) {
    %c0_i32 = arith.constant 0 : i32
    %c0_i32_0 = arith.constant 0 : i32
    return %arg0, %c0_i32, %arg1 : i32, i32, i32
  }
}

</mosaic_0001>

<llo_original>
// kernel: tpu_custom_call.1
$region0: #{tpu_custom_call.1}
  #allocation0 [shape = 'u32[]', space=smem, size = 0x4, offset = 0x4, fixed_abs, tag = 'smem constant byte address 0x4 - core index']
  #allocation1 [shape = 'u32[144,128]{1,0:T(1,128)}', space=vmem, size = 0x12000, scoped, tag = 'internal scratch']
  %s0 = inlined_call_operand.hbm [shape: f32[2,4,256], index: 0, kind: input, shape index: {}]
  %s1 = inlined_call_operand.hbm [shape: f32[2,4,256], index: 1, kind: output, shape index: {}]
  %s2 = sld [smem:[#allocation0]]
  $region18: #{tpu_custom_call.1} parent=0
    _
  %s4 = ssub.s32 1, %s2
  %s5 = scalar_select 0, %s4, %s2
  $region1: #{tpu_custom_call.1} parent=0
    #allocation2 [shape = 'u8[8192]{0}', space=vmem, size = 0x2000, scoped, tag = 'input window, operand 0, single buffered']
    #allocation3 [shape = 's32[1]{0}', space=sflag, size = 0x4, scoped, tag = 'scoped memory for tpu_custom_call.1']
    #allocation4 [shape = 's32[1]{0}', space=sflag, size = 0x4, scoped, tag = 'scoped memory for tpu_custom_call.1']
    #allocation5 [shape = 'u8[8192]{0}', space=vmem, size = 0x2000, scoped, tag = 'output window, operand 0, single buffered']
    %6 = vsyncpa [#allocation3], 0
    %7 = vsyncpa [#allocation4], 0
    // Predicated region
    $region2: #{tpu_custom_call.1} parent=1 // pred_check
      _
    $region3: #{tpu_custom_call.1} parent=1 // pred_check_branch
      %9 = sbr.rel (0) target = $region5
    $region4: #{tpu_custom_call.1} parent=1 // pred_region
      %s11 = ssub.s32 256, 256
      %12 = vsyncadd [#allocation3], %s11
      %s13 = sshll.u32 [#allocation2], 4
      %s14 = int_to_ptr.vmem [resolvable:$true] %s13
      %19 = dma.hbm_to_vmem [thread:$0]  %s0, 256, %s14, [#allocation3], 128, 128, 8
    $region5: #{tpu_custom_call.1} parent=1 // pred_fallthru
      _
    // Predicated region
    $region6: #{tpu_custom_call.1} parent=1 // pred_check
      _
    $region7: #{tpu_custom_call.1} parent=1 // pred_check_branch
      %21 = sbr.rel (0) target = $region9
    $region8: #{tpu_custom_call.1} parent=1 // pred_region
      %22 = dma.done [#allocation3], 256
    $region9: #{tpu_custom_call.1} parent=1 // pred_fallthru
      _
    %v23 = vld [vmem:[#allocation2] sm:$0xff]
    %v24 = vld [vmem:[#allocation2 + $0x8] sm:$0xff]
    %v25 = vmul.f32 %v23, %v23
    %v26 = vmul.f32 %v24, %v24
    %v29 = vcombine.high %v25, %v25
    %v30 = vcombine.high %v26, %v26
    %vm33 = vcmask 1043456
    %v34 = vsel %vm33, %v25, 0.0
    %v35 = vrot.slane %v34, 4
    %v36 = vadd.f32 %v34, %v35
    %v37 = vrot.slane %v36, 2
    %v38 = vadd.f32 %v36, %v37
    %v39 = vrot.slane %v38, 1
    %v40 = vadd.f32 %v38, %v39
    %v41 = vsel %vm33, %v29, 0.0
    %v42 = vrot.slane %v41, 4
    %v43 = vadd.f32 %v41, %v42
    %v44 = vrot.slane %v43, 2
    %v45 = vadd.f32 %v43, %v44
    %v46 = vrot.slane %v45, 1
    %v47 = vadd.f32 %v45, %v46
    %v48 = vsel %vm33, %v26, 0.0
    %v49 = vrot.slane %v48, 4
    %v50 = vadd.f32 %v48, %v49
    %v51 = vrot.slane %v50, 2
    %v52 = vadd.f32 %v50, %v51
    %v53 = vrot.slane %v52, 1
    %v54 = vadd.f32 %v52, %v53
    %v55 = vsel %vm33, %v30, 0.0
    %v56 = vrot.slane %v55, 4
    %v57 = vadd.f32 %v55, %v56
    %v58 = vrot.slane %v57, 2
    %v59 = vadd.f32 %v57, %v58
    %v60 = vrot.slane %v59, 1
    %v61 = vadd.f32 %v59, %v60
    %v62 = vmax.f32 %v40, 1e-24
    %v63 = vmax.f32 %v47, 1e-24
    %v64 = vmax.f32 %v54, 1e-24
    %v65 = vmax.f32 %v61, 1e-24
    %v66 = vrsqrt.pop %v62
    %v67 = vrsqrt.pop %v63
    %v68 = vrsqrt.pop %v64
    %v69 = vrsqrt.pop %v65
    %v74 = vcombine.low %v66, %v67
    %v75 = vcombine.low %v68, %v69
    %v78 = vmul.f32 %v23, %v74
    %v79 = vmul.f32 %v24, %v75
    %80 = vst [vmem:[#allocation5] sm:$0xff] %v78
    %81 = vst [vmem:[#allocation5 + $0x8] sm:$0xff] %v79
    // Predicated region
    $region10: #{tpu_custom_call.1} parent=1 // pred_check
      _
    $region11: #{tpu_custom_call.1} parent=1 // pred_check_branch
      %83 = sbr.rel (0) target = $region13
    $region12: #{tpu_custom_call.1} parent=1 // pred_region
      %s85 = ssub.s32 256, 256
      %86 = vsyncadd [#allocation4], %s85
      %s87 = sshll.u32 [#allocation5], 4
      %s88 = int_to_ptr.vmem [resolvable:$true] %s87
      %93 = dma.vmem_to_hbm [thread:$0]  %s88, 256, %s1, [#allocation4], 128, 128, 8
    $region13: #{tpu_custom_call.1} parent=1 // pred_fallthru
      _
    // Predicated region
    $region14: #{tpu_custom_call.1} parent=1 // pred_check
      _
    $region15: #{tpu_custom_call.1} parent=1 // pred_check_branch
      %95 = sbr.rel (0) target = $region17
    $region16: #{tpu_custom_call.1} parent=1 // pred_region
      %96 = dma.done [#allocation4], 256
    $region17: #{tpu_custom_call.1} parent=1 // pred_fallthru
      _
    %97 = vsyncpa [#allocation3], 1
    %98 = vsyncpa [#allocation4], 1

</llo_original>
